<compile_context>
chip_gen: v6e
topology: v6e:2x2x1
jax: 0.10.0
libtpu: 0.0.40
codegen_flags: <defaults>
</compile_context>

<pallas_src>
import numpy as np
import jax
import jax.numpy as jnp
from jax.experimental import pallas as pl
from jax.experimental.pallas import tpu as pltpu

_LN10 = float(np.log(10.0))


# ---------------------------------------------------------------------------
# Host-side glue: port of AnalyticSFH._create_t_age (buffer construction).
# ---------------------------------------------------------------------------
def create_t_age(tau_edges, n_sub):
    tau_edges = np.asarray(tau_edges, dtype=np.float64)
    if n_sub == 1:
        return tau_edges.astype(np.float32)
    n_age = tau_edges.shape[0]
    log_tau_edges = np.log10(tau_edges)
    t_age = np.zeros(n_age + (n_sub - 1) * (n_age - 1), dtype=np.float64)
    for i_age in range(n_age - 1):
        lower = log_tau_edges[i_age]
        upper = log_tau_edges[i_age + 1]
        t_age[i_age * n_sub:(i_age + 1) * n_sub] = np.logspace(lower, upper, n_sub + 1)[:-1]
    t_age[-1] = tau_edges[-1]
    return t_age.astype(np.float32)


# ---------------------------------------------------------------------------
# Host-side: trapezoid + n_sub-binning weights in TRANSPOSED form,
#   W_T[k, j] such that  out[k, :] = sum_j W_T[k, j] * sfr[j, :]
# reproduces  sum over bin k of 0.5*(sfr[j+1]+sfr[j])*(t[j+1]-t[j]).
# Computed once per t_age buffer (t_age is a fixed module buffer).
# ---------------------------------------------------------------------------
def trapz_bin_weights_T(t_age, n_sub):
    t = np.asarray(t_age, dtype=np.float64)
    T = t.shape[0]
    assert n_sub == 1 or (T - 1) % n_sub == 0, "(T-1) must be divisible by n_sub"
    dt = t[1:] - t[:-1]                       # (T-1,)
    n_bins = (T - 1) // n_sub
    W_T = np.zeros((n_bins, T), dtype=np.float64)
    for j in range(T - 1):
        k = j // n_sub
        W_T[k, j] += 0.5 * dt[j]
        W_T[k, j + 1] += 0.5 * dt[j]
    return W_T.astype(np.float32)


# ---------------------------------------------------------------------------
# Pallas kernel: derive_sfh (exp-declining stand-in) + trapz/binning as a matmul.
# Batch on the lane axis; t_age on the sublane axis.
# ---------------------------------------------------------------------------
def _analytic_sfh_kernel(params_ref, t_age_ref, wt_ref, out_ref):
    log_tau = params_ref[...]                          # (1, TB)   batch on lanes
    # inv_tau = 10^(-log_tau): one transcendental per column instead of per-element divide.
    inv_tau = jnp.exp(log_tau * (-_LN10))              # (1, TB)
    t = t_age_ref[...]                                 # (T, 1)

    # TODO(synk): derive_sfh is abstract in AnalyticSFH; exp-declining SFH stands in.
    sfr = jnp.exp(-(t * inv_tau))                      # (T, TB), lane-dense EUP exp

    # Trapezoid integration + n_sub binning folded into one MXU matmul.
    # Output block (n_bins, TB) is lane-dense -> unmasked stores.
    out_ref[...] = jnp.dot(wt_ref[...], sfr, preferred_element_type=jnp.float32)


def _round_up(x, m):
    return (x + m - 1) // m * m


def analytic_sfh_forward(params, t_age, n_sub, *, tile_b=None):
    """params: (B, 1) float32 (log10 tau); t_age: (T,) float32 buffer."""
    B = params.shape[0]
    T = t_age.shape[0]
    assert n_sub == 1 or (T - 1) % n_sub == 0, "(T-1) must be divisible by n_sub"
    n_bins = (T - 1) // n_sub

    # Host-precomputed constants (t_age is a fixed buffer).
    W_T = jnp.asarray(trapz_bin_weights_T(np.asarray(t_age), n_sub))   # (n_bins, T)
    t_age_col = t_age.reshape(T, 1)
    params_row = params.astype(jnp.float32).reshape(1, B)

    # --- batch-tile selection (batch on the lane axis -> multiples of 128) ---
    T_pad = _round_up(T, 8)
    nb_pad = _round_up(n_bins, 8)
    # Per-lane f32 bytes per grid step: 2x double-buffered params block (8 sublanes),
    # 2x double-buffered out block, plus the sfr temporary. Constants are negligible.
    per_lane_bytes = 4 * (2 * 8 + 2 * nb_pad + T_pad)
    vmem_budget = 8 * 1024 * 1024      # conservative: fits v5e 16 MiB scoped / v7x 64 MiB
    max_tile_vmem = max(128, (vmem_budget // per_lane_bytes) // 128 * 128)

    B_pad0 = _round_up(B, 128)
    if tile_b is None:
        tile_b = min(4096, max_tile_vmem, B_pad0)
    else:
        tile_b = min(_round_up(max(tile_b, 128), 128), max_tile_vmem, B_pad0)
    # v7x megacore: prefer >= 2 grid steps so the "parallel" axis can shard across 2 TCs.
    if tile_b >= B_pad0 and B_pad0 >= 256:
        tile_b = _round_up(pl.cdiv(B_pad0, 2), 128)
    n_tiles = pl.cdiv(B_pad0, tile_b)
    B_pad = n_tiles * tile_b

    if B_pad != B:
        params_in = jnp.zeros((1, B_pad), jnp.float32).at[:, :B].set(params_row)
    else:
        params_in = params_row

    out = pl.pallas_call(
        _analytic_sfh_kernel,
        out_shape=jax.ShapeDtypeStruct((n_bins, B_pad), jnp.float32),
        grid=(n_tiles,),
        in_specs=[
            pl.BlockSpec((1, tile_b), lambda i: (0, i)),     # params tile (batch on lanes)
            pl.BlockSpec((T, 1), lambda i: (0, 0)),          # resident t_age column
            pl.BlockSpec((n_bins, T), lambda i: (0, 0)),     # resident transposed weights
        ],
        out_specs=pl.BlockSpec((n_bins, tile_b), lambda i: (0, i)),
        compiler_params=pltpu.CompilerParams(
            dimension_semantics=("parallel",)),
    )(params_in, t_age_col, W_T)

    # (n_bins, B) -> (B, n_bins): cheap XLA layout plumbing outside the kernel.
    return out[:, :B].T


# ---------------------------------------------------------------------------
# Pure-JAX reference (original module math) for a correctness check.
# ---------------------------------------------------------------------------
def reference_forward(params, t_age, n_sub):
    t = t_age[None, :]
    tau = jnp.power(10.0, params)
    sfr = jnp.exp(-t / tau)
    trap = 0.5 * (sfr[:, 1:] + sfr[:, :-1]) * (t[:, 1:] - t[:, :-1])
    if n_sub == 1:
        return trap
    return jnp.sum(trap.reshape(trap.shape[0], -1, n_sub), axis=-1)


if __name__ == "__main__":
    n_sub = 16
    n_age = 9                                    # number of tau_edges
    B = 16                                       # batch of parameter vectors

    # Deterministic synthetic SSP-library age-bin edges (Gyr), log-spaced.
    tau_edges = np.logspace(np.log10(0.01), np.log10(14.0), n_age)
    t_age_np = create_t_age(tau_edges, n_sub)    # (T,) with T = 9 + 15*8 = 129
    t_age = jnp.asarray(t_age_np)

    # Deterministic params: log10(tau) in [-0.5, 1.0], one parameter per sample.
    key = jax.random.PRNGKey(0)
    params = jax.random.uniform(key, (B, 1), dtype=jnp.float32, minval=-0.5, maxval=1.0)

    out = analytic_sfh_forward(params, t_age, n_sub)   # default tile selection
    out = jax.block_until_ready(out)

    ref = reference_forward(params, t_age, n_sub)
    assert out.shape == (B, n_age - 1), out.shape
    # Slightly relaxed rtol: inv_tau reformulation + matmul reassociation vs reference.
    assert jnp.allclose(out, ref, rtol=1e-4, atol=1e-6), (out, ref)

    print("KERNEL_OK")
</pallas_src>

<mosaic_0001>
module attributes {stable_mosaic.version = 11 : i64} {
  func.func @_analytic_sfh_kernel(%arg0: i32, %arg1: memref<1x128xf32, #tpu.memory_space<vmem>>, %arg2: memref<129x1xf32, #tpu.memory_space<vmem>>, %arg3: memref<8x129xf32, #tpu.memory_space<vmem>>, %arg4: memref<8x128xf32, #tpu.memory_space<vmem>>) attributes {dimension_semantics = [#tpu.dimension_semantics<parallel>], iteration_bounds = array<i64: 1>, scalar_prefetch = 0 : i64, scratch_operands = 0 : i64, tpu.core_type = #tpu.core_type<tc>, window_params = [{transform_indices = @transform_0, window_bounds = array<i64: 1, 128>}, {pipeline_mode = #tpu.pipeline_mode<synchronous>, transform_indices = @transform_1, window_bounds = array<i64: 129, 1>}, {pipeline_mode = #tpu.pipeline_mode<synchronous>, transform_indices = @transform_2, window_bounds = array<i64: 8, 129>}, {transform_indices = @transform_3, window_bounds = array<i64: 8, 128>}]} {
    %c0 = arith.constant 0 : index
    %c0_0 = arith.constant 0 : index
    %0 = vector.load %arg1[%c0, %c0_0] : memref<1x128xf32, #tpu.memory_space<vmem>>, vector<1x128xf32>
    %cst = arith.constant -2.30258512 : f32
    %1 = vector.broadcast %cst : f32 to vector<1x128xf32>
    %2 = arith.mulf %0, %1 : vector<1x128xf32>
    %3 = math.exp %2 : vector<1x128xf32>
    %c0_1 = arith.constant 0 : index
    %c0_2 = arith.constant 0 : index
    %4 = vector.load %arg2[%c0_1, %c0_2] : memref<129x1xf32, #tpu.memory_space<vmem>>, vector<129x1xf32>
    %5 = vector.broadcast %4 : vector<129x1xf32> to vector<129x128xf32>
    %6 = vector.broadcast %3 : vector<1x128xf32> to vector<129x128xf32>
    %7 = arith.mulf %5, %6 : vector<129x128xf32>
    %cst_3 = arith.constant 0.000000e+00 : f32
    %8 = vector.broadcast %cst_3 : f32 to vector<129x128xf32>
    %9 = arith.subf %8, %7 : vector<129x128xf32>
    %10 = math.exp %9 : vector<129x128xf32>
    %c0_4 = arith.constant 0 : index
    %c0_5 = arith.constant 0 : index
    %11 = vector.load %arg3[%c0_4, %c0_5] : memref<8x129xf32, #tpu.memory_space<vmem>>, vector<8x129xf32>
    %cst_6 = arith.constant dense<0.000000e+00> : vector<8x128xf32>
    %12 = tpu.matmul %11, %10, %cst_6 {dimension_numbers = #tpu.dot_dimension_numbers<[1], [0], [0], [1], [0, 0, 1, 1], [], []>} : vector<8x129xf32>, vector<129x128xf32>, vector<8x128xf32> -> vector<8x128xf32>
    %c0_7 = arith.constant 0 : index
    %c0_8 = arith.constant 0 : index
    %13 = vector.load %arg4[%c0_7, %c0_8] : memref<8x128xf32, #tpu.memory_space<vmem>>, vector<8x128xf32>
    tpu.vector_store %arg4[%c0_7, %c0_8], %12 {strides = array<i32>} : memref<8x128xf32, #tpu.memory_space<vmem>>, vector<8x128xf32>,
    return
  }
  func.func @transform_0(%arg0: i32) -> (i32, i32) {
    %c0_i32 = arith.constant 0 : i32
    %c0_i32_0 = arith.constant 0 : i32
    return %c0_i32, %arg0 : i32, i32
  }
  func.func @transform_1(%arg0: i32) -> (i32, i32) {
    %c0_i32 = arith.constant 0 : i32
    %c0_i32_0 = arith.constant 0 : i32
    %c0_i32_1 = arith.constant 0 : i32
    return %c0_i32, %c0_i32_0 : i32, i32
  }
  func.func @transform_2(%arg0: i32) -> (i32, i32) {
    %c0_i32 = arith.constant 0 : i32
    %c0_i32_0 = arith.constant 0 : i32
    %c0_i32_1 = arith.constant 0 : i32
    return %c0_i32, %c0_i32_0 : i32, i32
  }
  func.func @transform_3(%arg0: i32) -> (i32, i32) {
    %c0_i32 = arith.constant 0 : i32
    %c0_i32_0 = arith.constant 0 : i32
    return %c0_i32, %arg0 : i32, i32
  }
}

</mosaic_0001>

<llo_original>
// kernel: tpu_custom_call.1
$region0: #{tpu_custom_call.1}
  #allocation0 [shape = 'u32[]', space=smem, size = 0x4, offset = 0x4, fixed_abs, tag = 'smem constant byte address 0x4 - core index']
  #allocation1 [shape = 'u32[144,128]{1,0:T(1,128)}', space=vmem, size = 0x12000, scoped, tag = 'internal scratch']
  %s0 = inlined_call_operand.vmem [shape: f32[1,128], index: 0, kind: input, shape index: {}]
  %s1 = inlined_call_operand.vmem [shape: f32[129,1], index: 1, kind: input, shape index: {}]
  %s2 = inlined_call_operand.vmem [shape: f32[8,129], index: 2, kind: input, shape index: {}]
  %s3 = inlined_call_operand.hbm [shape: f32[8,128], index: 3, kind: output, shape index: {}]
  %s4 = sld [smem:[#allocation0]]
  $region22: #{tpu_custom_call.1} parent=0
    _
  %s6 = ssub.s32 1, %s4
  %s7 = scalar_select 0, %s6, %s4
  $region1: #{tpu_custom_call.1} parent=0
    #allocation2 [shape = 'u8[4096]{0}', space=vmem, size = 0x1000, scoped, tag = 'output window, operand 0, single buffered']
    #allocation3 [shape = 's32[1]{0}', space=sflag, size = 0x4, scoped, tag = 'scoped memory for tpu_custom_call.1']
    %8 = vsyncpa [#allocation3], 0
    // Predicated region
    $region2: #{tpu_custom_call.1} parent=1 // pred_check
      _
    $region3: #{tpu_custom_call.1} parent=1 // pred_check_branch
      %10 = sbr.rel (0) target = $region5
    $region4: #{tpu_custom_call.1} parent=1 // pred_region
      _
    $region5: #{tpu_custom_call.1} parent=1 // pred_fallthru
      _
    // Predicated region
    $region6: #{tpu_custom_call.1} parent=1 // pred_check
      _
    $region7: #{tpu_custom_call.1} parent=1 // pred_check_branch
      %12 = sbr.rel (0) target = $region9
    $region8: #{tpu_custom_call.1} parent=1 // pred_region
      _
    $region9: #{tpu_custom_call.1} parent=1 // pred_fallthru
      _
    // Predicated region
    $region10: #{tpu_custom_call.1} parent=1 // pred_check
      _
    $region11: #{tpu_custom_call.1} parent=1 // pred_check_branch
      %14 = sbr.rel (0) target = $region13
    $region12: #{tpu_custom_call.1} parent=1 // pred_region
      _
    $region13: #{tpu_custom_call.1} parent=1 // pred_fallthru
      _
    %v15 = vld [vmem:[%s0] sm:$0x1]
    %v16 = vmul.f32 %v15, -2.3025851
    %v17 = vmul.f32 %v16, 1.442695
    %v18 = vpow.pop %v17
    %v19 = vld [vmem:[%s1] sm:$0xff]
    %v20 = vld [vmem:[%s1 + $0x8] sm:$0xff]
    %v21 = vld [vmem:[%s1 + $0x10] sm:$0xff]
    %v22 = vld [vmem:[%s1 + $0x18] sm:$0xff]
    %v23 = vld [vmem:[%s1 + $0x20] sm:$0xff]
    %v24 = vld [vmem:[%s1 + $0x28] sm:$0xff]
    %v25 = vld [vmem:[%s1 + $0x30] sm:$0xff]
    %v26 = vld [vmem:[%s1 + $0x38] sm:$0xff]
    %v27 = vld [vmem:[%s1 + $0x40] sm:$0xff]
    %v28 = vld [vmem:[%s1 + $0x48] sm:$0xff]
    %v29 = vld [vmem:[%s1 + $0x50] sm:$0xff]
    %v30 = vld [vmem:[%s1 + $0x58] sm:$0xff]
    %v31 = vld [vmem:[%s1 + $0x60] sm:$0xff]
    %v32 = vld [vmem:[%s1 + $0x68] sm:$0xff]
    %v33 = vld [vmem:[%s1 + $0x70] sm:$0xff]
    %v34 = vld [vmem:[%s1 + $0x78] sm:$0xff]
    %v35 = vld [vmem:[%s1 + $0x80] sm:$0x1]
    %37 = vset.pattern.permute.xlu0 0
    %38 = vperm.xlu0 %37, %v19
    %v39 = vpop.permute.xlu0 %38
    %42 = vset.pattern.permute.xlu0 0
    %43 = vperm.xlu0 %42, %v20
    %v44 = vpop.permute.xlu0 %43
    %47 = vset.pattern.permute.xlu0 0
    %48 = vperm.xlu0 %47, %v21
    %v49 = vpop.permute.xlu0 %48
    %52 = vset.pattern.permute.xlu0 0
    %53 = vperm.xlu0 %52, %v22
    %v54 = vpop.permute.xlu0 %53
    %57 = vset.pattern.permute.xlu0 0
    %58 = vperm.xlu0 %57, %v23
    %v59 = vpop.permute.xlu0 %58
    %62 = vset.pattern.permute.xlu0 0
    %63 = vperm.xlu0 %62, %v24
    %v64 = vpop.permute.xlu0 %63
    %67 = vset.pattern.permute.xlu0 0
    %68 = vperm.xlu0 %67, %v25
    %v69 = vpop.permute.xlu0 %68
    %72 = vset.pattern.permute.xlu0 0
    %73 = vperm.xlu0 %72, %v26
    %v74 = vpop.permute.xlu0 %73
    %77 = vset.pattern.permute.xlu0 0
    %78 = vperm.xlu0 %77, %v27
    %v79 = vpop.permute.xlu0 %78
    %82 = vset.pattern.permute.xlu0 0
    %83 = vperm.xlu0 %82, %v28
    %v84 = vpop.permute.xlu0 %83
    %87 = vset.pattern.permute.xlu0 0
    %88 = vperm.xlu0 %87, %v29
    %v89 = vpop.permute.xlu0 %88
    %92 = vset.pattern.permute.xlu0 0
    %93 = vperm.xlu0 %92, %v30
    %v94 = vpop.permute.xlu0 %93
    %97 = vset.pattern.permute.xlu0 0
    %98 = vperm.xlu0 %97, %v31
    %v99 = vpop.permute.xlu0 %98
    %102 = vset.pattern.permute.xlu0 0
    %103 = vperm.xlu0 %102, %v32
    %v104 = vpop.permute.xlu0 %103
    %107 = vset.pattern.permute.xlu0 0
    %108 = vperm.xlu0 %107, %v33
    %v109 = vpop.permute.xlu0 %108
    %112 = vset.pattern.permute.xlu0 0
    %113 = vperm.xlu0 %112, %v34
    %v114 = vpop.permute.xlu0 %113
    %117 = vset.pattern.permute.xlu0 0
    %118 = vperm.xlu0 %117, %v35
    %v119 = vpop.permute.xlu0 %118
    %v122 = vlaneseq
    %v123 = vshrl.u32 %v122, 7
    %v124 = vsub.s32 0, %v123
    %v125 = vrot.slane %v18, %v124
    %v127 = vmul.f32 %v39, %v125
    %v128 = vmul.f32 %v44, %v125
    %v129 = vmul.f32 %v49, %v125
    %v130 = vmul.f32 %v54, %v125
    %v131 = vmul.f32 %v59, %v125
    %v132 = vmul.f32 %v64, %v125
    %v133 = vmul.f32 %v69, %v125
    %v134 = vmul.f32 %v74, %v125
    %v135 = vmul.f32 %v79, %v125
    %v136 = vmul.f32 %v84, %v125
    %v137 = vmul.f32 %v89, %v125
    %v138 = vmul.f32 %v94, %v125
    %v139 = vmul.f32 %v99, %v125
    %v140 = vmul.f32 %v104, %v125
    %v141 = vmul.f32 %v109, %v125
    %v142 = vmul.f32 %v114, %v125
    %v143 = vmul.f32 %v119, %v125
    %v144 = vsub.f32 0.0, %v127
    %v145 = vsub.f32 0.0, %v128
    %v146 = vsub.f32 0.0, %v129
    %v147 = vsub.f32 0.0, %v130
    %v148 = vsub.f32 0.0, %v131
    %v149 = vsub.f32 0.0, %v132
    %v150 = vsub.f32 0.0, %v133
    %v151 = vsub.f32 0.0, %v134
    %v152 = vsub.f32 0.0, %v135
    %v153 = vsub.f32 0.0, %v136
    %v154 = vsub.f32 0.0, %v137
    %v155 = vsub.f32 0.0, %v138
    %v156 = vsub.f32 0.0, %v139
    %v157 = vsub.f32 0.0, %v140
    %v158 = vsub.f32 0.0, %v141
    %v159 = vsub.f32 0.0, %v142
    %v160 = vsub.f32 0.0, %v143
    %v161 = vmul.f32 %v144, 1.442695
    %v162 = vpow.pop %v161
    %v163 = vmul.f32 %v145, 1.442695
    %v164 = vpow.pop %v163
    %v165 = vmul.f32 %v146, 1.442695
    %v166 = vpow.pop %v165
    %v167 = vmul.f32 %v147, 1.442695
    %v168 = vpow.pop %v167
    %v169 = vmul.f32 %v148, 1.442695
    %v170 = vpow.pop %v169
    %v171 = vmul.f32 %v149, 1.442695
    %v172 = vpow.pop %v171
    %v173 = vmul.f32 %v150, 1.442695
    %v174 = vpow.pop %v173
    %v175 = vmul.f32 %v151, 1.442695
    %v176 = vpow.pop %v175
    %v177 = vmul.f32 %v152, 1.442695
    %v178 = vpow.pop %v177
    %v179 = vmul.f32 %v153, 1.442695
    %v180 = vpow.pop %v179
    %v181 = vmul.f32 %v154, 1.442695
    %v182 = vpow.pop %v181
    %v183 = vmul.f32 %v155, 1.442695
    %v184 = vpow.pop %v183
    %v185 = vmul.f32 %v156, 1.442695
    %v186 = vpow.pop %v185
    %v187 = vmul.f32 %v157, 1.442695
    %v188 = vpow.pop %v187
    %v189 = vmul.f32 %v158, 1.442695
    %v190 = vpow.pop %v189
    %v191 = vmul.f32 %v159, 1.442695
    %v192 = vpow.pop %v191
    %v193 = vmul.f32 %v160, 1.442695
    %v194 = vpow.pop %v193
    %v195 = vld [vmem:[%s2] sm:$0xff]
    %v196 = vld [vmem:[%s2 + $0x8] sm:$0xff]
    %vm197 = vcmask 7168
    %v199 = vsel %vm197, %v196, 0
    %vm201 = vcmask 1040384
    %v203 = vsel %vm201, %v194, 0
    %205 = vmatprep.subr.mxu0 0.0
    %206 = vmatpush1.msra.mxu0 %v192
    %207 = vmatprep.subr.mxu0 0.0
    %208 = vmatpush1.msra.mxu0 %v190
    %209 = vmatprep.subr.mxu0 0.0
    %210 = vmatpush1.msra.mxu0 %v188
    %211 = vmatprep.subr.mxu0 0.0
    %212 = vmatpush1.msra.mxu0 %v186
    %213 = vmatprep.subr.mxu0 0.0
    %214 = vmatpush1.msra.mxu0 %v184
    %215 = vmatprep.subr.mxu0 0.0
    %216 = vmatpush1.msra.mxu0 %v182
    %217 = vmatprep.subr.mxu0 0.0
    %218 = vmatpush1.msra.mxu0 %v180
    %219 = vmatprep.subr.mxu0 0.0
    %220 = vmatpush1.msra.mxu0 %v178
    %221 = vmatprep.subr.mxu0 0.0
    %222 = vmatpush1.msra.mxu0 %v176
    %223 = vmatprep.subr.mxu0 0.0
    %224 = vmatpush1.msra.mxu0 %v174
    %225 = vmatprep.subr.mxu0 0.0
    %226 = vmatpush1.msra.mxu0 %v172
    %227 = vmatprep.subr.mxu0 0.0
    %228 = vmatpush1.msra.mxu0 %v170
    %229 = vmatprep.subr.mxu0 0.0
    %230 = vmatpush1.msra.mxu0 %v168
    %231 = vmatprep.subr.mxu0 0.0
    %232 = vmatpush1.msra.mxu0 %v166
    %233 = vmatprep.subr.mxu0 0.0
    %234 = vmatpush1.msra.mxu0 %v164
    %235 = vmatprep.subr.mxu0 0.0
    %236 = vmatpush1.msra.mxu0 %v162
    %237 = vmatprep.subr.mxu0 0.0
    %238 = vmatpush2.msra.mxu0 0.0
    %239 = vmatprep.subr.mxu0 0.0
    %240 = vmatpush2.msra.mxu0 0.0
    %241 = vmatprep.subr.mxu0 0.0
    %242 = vmatpush2.msra.mxu0 0.0
    %243 = vmatprep.subr.mxu0 0.0
    %244 = vmatpush2.msra.mxu0 0.0
    %245 = vmatprep.subr.mxu0 0.0
    %246 = vmatpush2.msra.mxu0 0.0
    %247 = vmatprep.subr.mxu0 0.0
    %248 = vmatpush2.msra.mxu0 0.0
    %249 = vmatprep.subr.mxu0 0.0
    %250 = vmatpush2.msra.mxu0 0.0
    %251 = vmatprep.subr.mxu0 0.0
    %252 = vmatpush2.msra.mxu0 0.0
    %253 = vmatprep.subr.mxu0 0.0
    %254 = vmatpush2.msra.mxu0 0.0
    %255 = vmatprep.subr.mxu0 0.0
    %256 = vmatpush2.msra.mxu0 0.0
    %257 = vmatprep.subr.mxu0 0.0
    %258 = vmatpush2.msra.mxu0 0.0
    %259 = vmatprep.subr.mxu0 0.0
    %260 = vmatpush2.msra.mxu0 0.0
    %261 = vmatprep.subr.mxu0 0.0
    %262 = vmatpush2.msra.mxu0 0.0
    %263 = vmatprep.subr.mxu0 0.0
    %264 = vmatpush2.msra.mxu0 0.0
    %265 = vmatprep.subr.mxu0 0.0
    %266 = vmatpush2.msra.mxu0 0.0
    %267 = vmatprep.subr.mxu0 0.0
    %268 = vmatpush2.msra.mxu0 %v203
    %269 = vmatprep.mubr.f32.mxu0 %v199
    %270 = vmatmul.mubr.f32.gmra.mxu0 %v195
    %v271 = vpop.f32.mrf.mxu0
    %v272 = vadd.f32 0.0, %v271
    %v273 = vpop.f32.mrf.mxu0
    %274 = vdwg.mxu0
    %275 = vst [vmem:[#allocation2] sm:$0xff] %v272
    // Predicated region
    $region14: #{tpu_custom_call.1} parent=1 // pred_check
      _
    $region15: #{tpu_custom_call.1} parent=1 // pred_check_branch
      %277 = sbr.rel (0) target = $region17
    $region16: #{tpu_custom_call.1} parent=1 // pred_region
      %s279 = ssub.s32 128, 128
      %280 = vsyncadd [#allocation3], %s279
      %s282 = sshll.u32 [#allocation2], 4
      %s283 = int_to_ptr.vmem [resolvable:$true] %s282
      %285 = dma.vmem_to_hbm [thread:$0]  %s283, 128, %s3, [#allocation3]
    $region17: #{tpu_custom_call.1} parent=1 // pred_fallthru
      _
    // Predicated region
    $region18: #{tpu_custom_call.1} parent=1 // pred_check
      _
    $region19: #{tpu_custom_call.1} parent=1 // pred_check_branch
      %287 = sbr.rel (0) target = $region21
    $region20: #{tpu_custom_call.1} parent=1 // pred_region
      %288 = dma.done [#allocation3], 128
    $region21: #{tpu_custom_call.1} parent=1 // pred_fallthru
      _
    %289 = vsyncpa [#allocation3], 1

</llo_original>
